<compile_context>
chip_gen: v6e
topology: v6e:2x2x1
jax: 0.10.0
libtpu: 0.0.40
codegen_flags: <defaults>
</compile_context>

<pallas_src>
import numpy as np
import jax
import jax.numpy as jnp
from jax.experimental import pallas as pl
from jax.experimental.pallas import tpu as pltpu

_LANES = 128
_SUBLANES = 8
_TILE_BYTES = 4 * 1024 * 1024          # per-buffer tile target (~4 MiB)
_VMEM_LIMIT_BYTES = 48 * 1024 * 1024   # <= 64 MiB physical (v7x); ample elsewhere


def init_pe_vector(max_len: int, d_model: int, dtype=jnp.float32) -> jnp.ndarray:
    """Deterministic PE buffer, matching the PyTorch _init_PE_vector exactly.

    pos runs 1..max_len; pe_cost = pos / 10000 ** (2*i/d_model);
    sin for even feature index i, cos for odd i.
    """
    pos = np.arange(1, max_len + 1, dtype=np.float64)[:, None]        # (L, 1)
    i = np.arange(d_model, dtype=np.float64)[None, :]                 # (1, D)
    cost = pos / np.power(10000.0, 2.0 * i / d_model)                 # (L, D)
    pe = np.where((np.arange(d_model) % 2 == 0)[None, :],
                  np.sin(cost), np.cos(cost))
    return jnp.asarray(pe, dtype=dtype)                               # (L, D)


def _pe_add_kernel(x_ref, pe_ref, o_ref):
    # Plain VPU add. Covers both paths:
    #   squeezed-batch path : x (TR, 128)     + pe (TR, 128)
    #   batch-blocked path  : x (TB, Rp, 128) + pe (Rp, 128)  (broadcast over TB)
    o_ref[...] = x_ref[...] + pe_ref[...]


def positional_encoding_forward(x: jnp.ndarray, pe_vector: jnp.ndarray) -> jnp.ndarray:
    """X + PE_vector[:seq_len][None] as a lane-dense, HBM-streaming Pallas kernel."""
    B, S, D = x.shape
    if S > pe_vector.shape[0]:
        raise ValueError(
            f"seq_len={S} exceeds max_len={pe_vector.shape[0]} of the PE buffer")
    if D != pe_vector.shape[1]:
        raise ValueError(
            f"d_model mismatch: x has {D}, PE buffer has {pe_vector.shape[1]}")

    itemsize = jnp.dtype(x.dtype).itemsize

    # Only slice / cast when actually needed (hoist-able by the caller / jit).
    pe = pe_vector[:S, :] if S < pe_vector.shape[0] else pe_vector
    if pe.dtype != x.dtype:
        pe = pe.astype(x.dtype)

    # ---- Lane-dense flatten (pad odd S*D up to a multiple of 128). ----
    SD = S * D
    pad = (-SD) % _LANES
    Rp = (SD + pad) // _LANES
    x2 = x.reshape(B, SD)
    pe1 = pe.reshape(SD)
    if pad:
        x2 = jnp.pad(x2, ((0, 0), (0, pad)))
        pe1 = jnp.pad(pe1, (0, pad))
    x3 = x2.reshape(B, Rp, _LANES)
    pe2 = pe1.reshape(Rp, _LANES)

    # Sublane-packing-aware row granularity: 8 (f32), 16 (bf16), 32 (int8/fp8).
    sub = _SUBLANES * max(1, 4 // itemsize)
    target_rows = _TILE_BYTES // (_LANES * itemsize)

    if Rp <= target_rows:
        # ---- Small-problem path: per-batch slab fits one tile.            ----
        # Block the batch axis so each grid step still moves a few MiB, and
        # fetch PE exactly once (constant block index across all steps).
        TB = max(1, min(B, _TILE_BYTES // max(1, Rp * _LANES * itemsize)))
        out3 = pl.pallas_call(
            _pe_add_kernel,
            out_shape=jax.ShapeDtypeStruct((B, Rp, _LANES), x.dtype),
            grid_spec=pltpu.PrefetchScalarGridSpec(
                num_scalar_prefetch=0,
                grid=(pl.cdiv(B, TB),),
                in_specs=[
                    pl.BlockSpec((TB, Rp, _LANES), lambda b: (b, 0, 0)),
                    pl.BlockSpec((Rp, _LANES), lambda b: (0, 0)),
                ],
                out_specs=pl.BlockSpec((TB, Rp, _LANES), lambda b: (b, 0, 0)),
            ),
            compiler_params=pltpu.CompilerParams(
                dimension_semantics=("parallel",),
                vmem_limit_bytes=_VMEM_LIMIT_BYTES,
            ),
        )(x3, pe2)
    else:
        # ---- Streaming path: tile rows, row-tile OUTER / batch INNER.      ----
        # PE's block index depends only on the row tile, so its DMA is skipped
        # across the inner batch axis (fetched once per row tile).
        TR = min(Rp, max(sub, (target_rows // sub) * sub))
        out3 = pl.pallas_call(
            _pe_add_kernel,
            out_shape=jax.ShapeDtypeStruct((B, Rp, _LANES), x.dtype),
            grid_spec=pltpu.PrefetchScalarGridSpec(
                num_scalar_prefetch=0,
                grid=(pl.cdiv(Rp, TR), B),
                in_specs=[
                    pl.BlockSpec((pl.Squeezed(), TR, _LANES),
                                 lambda r, b: (b, r, 0)),
                    pl.BlockSpec((TR, _LANES), lambda r, b: (r, 0)),
                ],
                out_specs=pl.BlockSpec((pl.Squeezed(), TR, _LANES),
                                       lambda r, b: (b, r, 0)),
            ),
            compiler_params=pltpu.CompilerParams(
                dimension_semantics=("parallel", "parallel"),
                vmem_limit_bytes=_VMEM_LIMIT_BYTES,
            ),
        )(x3, pe2)

    if pad:
        return out3.reshape(B, SD + pad)[:, :SD].reshape(B, S, D)
    return out3.reshape(B, S, D)


if __name__ == "__main__":
    # Module hyperparameters
    max_len = 16
    d_model = 32

    # Small deterministic input: (batch=2, seq_len=8, d_model=32)
    key = jax.random.PRNGKey(0)
    x = jax.random.normal(key, (2, 8, d_model), dtype=jnp.float32)

    pe_vector = init_pe_vector(max_len, d_model)

    out = positional_encoding_forward(x, pe_vector)
    out = jax.block_until_ready(out)

    # Reference check (plain JAX semantics of the PyTorch forward)
    ref = x + pe_vector[: x.shape[1], :][None, :, :]
    np.testing.assert_allclose(np.asarray(out), np.asarray(ref), rtol=1e-6, atol=1e-6)

    print("KERNEL_OK")
</pallas_src>

<mosaic_0001>
module attributes {stable_mosaic.version = 11 : i64} {
  func.func @_pe_add_kernel(%arg0: i32, %arg1: memref<2x2x128xf32, #tpu.memory_space<vmem>>, %arg2: memref<2x128xf32, #tpu.memory_space<vmem>>, %arg3: memref<2x2x128xf32, #tpu.memory_space<vmem>>) attributes {dimension_semantics = [#tpu.dimension_semantics<parallel>], iteration_bounds = array<i64: 1>, scalar_prefetch = 0 : i64, scratch_operands = 0 : i64, tpu.core_type = #tpu.core_type<tc>, window_params = [{transform_indices = @transform_0, window_bounds = array<i64: 2, 2, 128>}, {pipeline_mode = #tpu.pipeline_mode<synchronous>, transform_indices = @transform_1, window_bounds = array<i64: 2, 128>}, {transform_indices = @transform_2, window_bounds = array<i64: 2, 2, 128>}]} {
    %c0 = arith.constant 0 : index
    %c0_0 = arith.constant 0 : index
    %c0_1 = arith.constant 0 : index
    %0 = vector.load %arg1[%c0, %c0_0, %c0_1] : memref<2x2x128xf32, #tpu.memory_space<vmem>>, vector<2x2x128xf32>
    %c0_2 = arith.constant 0 : index
    %c0_3 = arith.constant 0 : index
    %1 = vector.load %arg2[%c0_2, %c0_3] : memref<2x128xf32, #tpu.memory_space<vmem>>, vector<2x128xf32>
    %2 = vector.shape_cast %1 : vector<2x128xf32> to vector<1x2x128xf32>
    %3 = vector.broadcast %2 : vector<1x2x128xf32> to vector<2x2x128xf32>
    %4 = arith.addf %0, %3 : vector<2x2x128xf32>
    %c0_4 = arith.constant 0 : index
    %c0_5 = arith.constant 0 : index
    %c0_6 = arith.constant 0 : index
    %5 = vector.load %arg3[%c0_4, %c0_5, %c0_6] : memref<2x2x128xf32, #tpu.memory_space<vmem>>, vector<2x2x128xf32>
    tpu.vector_store %arg3[%c0_4, %c0_5, %c0_6], %4 {strides = array<i32>} : memref<2x2x128xf32, #tpu.memory_space<vmem>>, vector<2x2x128xf32>,
    return
  }
  func.func @transform_0(%arg0: i32) -> (i32, i32, i32) {
    %c0_i32 = arith.constant 0 : i32
    %c0_i32_0 = arith.constant 0 : i32
    %c0_i32_1 = arith.constant 0 : i32
    return %arg0, %c0_i32, %c0_i32_0 : i32, i32, i32
  }
  func.func @transform_1(%arg0: i32) -> (i32, i32) {
    %c0_i32 = arith.constant 0 : i32
    %c0_i32_0 = arith.constant 0 : i32
    %c0_i32_1 = arith.constant 0 : i32
    return %c0_i32, %c0_i32_0 : i32, i32
  }
  func.func @transform_2(%arg0: i32) -> (i32, i32, i32) {
    %c0_i32 = arith.constant 0 : i32
    %c0_i32_0 = arith.constant 0 : i32
    %c0_i32_1 = arith.constant 0 : i32
    return %arg0, %c0_i32, %c0_i32_0 : i32, i32, i32
  }
}

</mosaic_0001>

<llo_original>
// kernel: tpu_custom_call.1
$region0: #{tpu_custom_call.1}
  #allocation0 [shape = 'u32[]', space=smem, size = 0x4, offset = 0x4, fixed_abs, tag = 'smem constant byte address 0x4 - core index']
  #allocation1 [shape = 'u32[144,128]{1,0:T(1,128)}', space=vmem, size = 0x12000, scoped, tag = 'internal scratch']
  %s0 = inlined_call_operand.hbm [shape: f32[2,2,128], index: 0, kind: input, shape index: {}]
  %s1 = inlined_call_operand.hbm [shape: f32[2,128], index: 1, kind: input, shape index: {}]
  %s2 = inlined_call_operand.hbm [shape: f32[2,2,128], index: 2, kind: output, shape index: {}]
  %s3 = sld [smem:[#allocation0]]
  $region26: #{tpu_custom_call.1} parent=0
    _
  %s5 = ssub.s32 1, %s3
  %s6 = scalar_select 0, %s5, %s3
  $region1: #{tpu_custom_call.1} parent=0
    #allocation2 [shape = 'u8[2048]{0}', space=vmem, size = 0x800, scoped, tag = 'input window, operand 0, single buffered']
    #allocation3 [shape = 's32[1]{0}', space=sflag, size = 0x4, scoped, tag = 'scoped memory for tpu_custom_call.1']
    #allocation4 [shape = 's32[1]{0}', space=sflag, size = 0x4, scoped, tag = 'scoped memory for tpu_custom_call.1']
    #allocation5 [shape = 'u8[1024]{0}', space=vmem, size = 0x400, scoped, tag = 'input window, operand 1, single buffered']
    #allocation6 [shape = 's32[1]{0}', space=sflag, size = 0x4, scoped, tag = 'scoped memory for tpu_custom_call.1']
    #allocation7 [shape = 'u8[2048]{0}', space=vmem, size = 0x800, scoped, tag = 'output window, operand 0, single buffered']
    %7 = vsyncpa [#allocation3], 0
    %8 = vsyncpa [#allocation6], 0
    %9 = vsyncpa [#allocation4], 0
    // Predicated region
    $region2: #{tpu_custom_call.1} parent=1 // pred_check
      _
    $region3: #{tpu_custom_call.1} parent=1 // pred_check_branch
      %11 = sbr.rel (0) target = $region5
    $region4: #{tpu_custom_call.1} parent=1 // pred_region
      %s13 = ssub.s32 64, 64
      %14 = vsyncadd [#allocation3], %s13
      %s15 = sshll.u32 [#allocation2], 4
      %s16 = int_to_ptr.vmem [resolvable:$true] %s15
      %21 = dma.hbm_to_vmem [thread:$0]  %s0, 64, %s16, [#allocation3], 32, 32, 2
    $region5: #{tpu_custom_call.1} parent=1 // pred_fallthru
      _
    // Predicated region
    $region6: #{tpu_custom_call.1} parent=1 // pred_check
      _
    $region7: #{tpu_custom_call.1} parent=1 // pred_check_branch
      %23 = sbr.rel (0) target = $region9
    $region8: #{tpu_custom_call.1} parent=1 // pred_region
      %s25 = ssub.s32 32, 32
      %26 = vsyncadd [#allocation6], %s25
      %s28 = sshll.u32 [#allocation5], 4
      %s29 = int_to_ptr.vmem [resolvable:$true] %s28
      %31 = dma.hbm_to_vmem [thread:$0]  %s1, 32, %s29, [#allocation6]
    $region9: #{tpu_custom_call.1} parent=1 // pred_fallthru
      _
    // Predicated region
    $region10: #{tpu_custom_call.1} parent=1 // pred_check
      _
    $region11: #{tpu_custom_call.1} parent=1 // pred_check_branch
      %33 = sbr.rel (0) target = $region13
    $region12: #{tpu_custom_call.1} parent=1 // pred_region
      %34 = dma.done [#allocation3], 64
    $region13: #{tpu_custom_call.1} parent=1 // pred_fallthru
      _
    // Predicated region
    $region14: #{tpu_custom_call.1} parent=1 // pred_check
      _
    $region15: #{tpu_custom_call.1} parent=1 // pred_check_branch
      %36 = sbr.rel (0) target = $region17
    $region16: #{tpu_custom_call.1} parent=1 // pred_region
      %37 = dma.done [#allocation6], 32
    $region17: #{tpu_custom_call.1} parent=1 // pred_fallthru
      _
    %v38 = vld [vmem:[#allocation2] sm:$0x3]
    %v39 = vld [vmem:[#allocation2 + $0x2] sm:$0x3]
    %v40 = vld [vmem:[#allocation5] sm:$0x3]
    %v41 = vadd.f32 %v38, %v40
    %v42 = vadd.f32 %v39, %v40
    %43 = vst [vmem:[#allocation7] sm:$0x3] %v41
    %44 = vst [vmem:[#allocation7 + $0x2] sm:$0x3] %v42
    // Predicated region
    $region18: #{tpu_custom_call.1} parent=1 // pred_check
      _
    $region19: #{tpu_custom_call.1} parent=1 // pred_check_branch
      %46 = sbr.rel (0) target = $region21
    $region20: #{tpu_custom_call.1} parent=1 // pred_region
      %s48 = ssub.s32 64, 64
      %49 = vsyncadd [#allocation4], %s48
      %s50 = sshll.u32 [#allocation7], 4
      %s51 = int_to_ptr.vmem [resolvable:$true] %s50
      %56 = dma.vmem_to_hbm [thread:$0]  %s51, 64, %s2, [#allocation4], 32, 32, 2
    $region21: #{tpu_custom_call.1} parent=1 // pred_fallthru
      _
    // Predicated region
    $region22: #{tpu_custom_call.1} parent=1 // pred_check
      _
    $region23: #{tpu_custom_call.1} parent=1 // pred_check_branch
      %58 = sbr.rel (0) target = $region25
    $region24: #{tpu_custom_call.1} parent=1 // pred_region
      %59 = dma.done [#allocation4], 64
    $region25: #{tpu_custom_call.1} parent=1 // pred_fallthru
      _
    %60 = vsyncpa [#allocation3], 1
    %61 = vsyncpa [#allocation6], 1
    %62 = vsyncpa [#allocation4], 1

</llo_original>
